<compile_context>
chip_gen: v5e
topology: v5e:2x2
jax: 0.10.0
libtpu: 0.0.40
codegen_flags: <defaults>
</compile_context>

<pallas_src>
import functools

import jax
import jax.numpy as jnp
from jax.experimental import pallas as pl
from jax.experimental.pallas import tpu as pltpu

_LANE = 128


def _pad_lane(f):
    return ((f + _LANE - 1) // _LANE) * _LANE


def _use_hw_first(f_in, f_out):
    """Pick the contraction order for  adj @ (h @ W)  (associativity-exact rewrite).

    True  -> order A:  t = h @ W   (width f_out), then adj @ t
    False -> order B:  t = adj @ h (width f_in),  then t @ W

    Decision uses lane-padded widths (MXU issue cost), not raw FLOPs; ties are broken
    toward the wider intermediate so vregs / the following ReLU stay lane-dense.
    """
    pa, pb = _pad_lane(f_out), _pad_lane(f_in)
    if pa != pb:
        return pa < pb          # smaller adj-multiply width wins once it matters
    return f_out >= f_in        # tie: prefer the wider (lane-dense) intermediate


def _gae_fused_kernel(x_ref, adj_ref, *rest, num_layers: int):
    w_refs = rest[:num_layers]
    out_ref = rest[num_layers]

    cdt = jnp.bfloat16
    # Cast in-kernel: inputs arrive as f32 (no wrapper-side XLA convert kernels).
    adj = adj_ref[...].astype(cdt)          # (N, N)  bf16, VMEM-resident
    h = x_ref[...]                          # (N, F0) f32; kept f32 between layers

    for li, w_ref in enumerate(w_refs):
        w = w_ref[...]
        f_in, f_out = w.shape
        if _use_hw_first(f_in, f_out):
            # order A: adj @ (h @ W)   (PyTorch's literal order)
            t = jnp.dot(h.astype(cdt), w.astype(cdt),
                        preferred_element_type=jnp.float32)
            h = jnp.dot(adj, t.astype(cdt), preferred_element_type=jnp.float32)
        else:
            # order B: (adj @ h) @ W   (associativity-exact rewrite)
            t = jnp.dot(adj, h.astype(cdt), preferred_element_type=jnp.float32)
            h = jnp.dot(t.astype(cdt), w.astype(cdt),
                        preferred_element_type=jnp.float32)
        if li < num_layers - 1:
            h = jnp.maximum(h, 0.0)         # ReLU, stays f32

    # TODO(synk): F_out=16 < 128 lanes -> masked vst; pack into a lane-dense slab if
    # profiling shows the epilogue store matters at larger N.
    out_ref[...] = h.astype(out_ref.dtype)


def gae_forward(x, adj, weights):
    """GAEModel.forward: fused stack of GCN layers; last layer has identity activation.

    dropout=0 / eval mode, so F.dropout is a no-op and omitted."""
    n, f0 = x.shape
    f_out = weights[-1].shape[1]
    num_layers = len(weights)
    assert n % 8 == 0, "node count must be a multiple of 8 (sublane tiling)"

    kernel = functools.partial(_gae_fused_kernel, num_layers=num_layers)

    in_specs = [
        pl.BlockSpec((n, f0), lambda i: (0, 0)),     # x   : full block, DMA'd once
        pl.BlockSpec((n, n), lambda i: (0, 0)),      # adj : full block, DMA'd once
    ] + [pl.BlockSpec(w.shape, lambda i: (0, 0)) for w in weights]

    # Advisory cost estimate (per-layer, using the actual contraction order chosen).
    flops = 0
    for w in weights:
        fi, fo = w.shape
        if _use_hw_first(fi, fo):
            flops += 2 * n * fi * fo + 2 * n * n * fo
        else:
            flops += 2 * n * n * fi + 2 * n * fi * fo
    bytes_accessed = 4 * (n * f0 + n * n + sum(int(w.size) for w in weights) + n * f_out)

    # Size-dependent VMEM budget: leave the default scoped limit alone when everything
    # is tiny; only raise it (with headroom for bf16 copies / temps) when residency
    # actually approaches the default. Capped below v5e/v6e physical (128 MiB); v7x's
    # 64 MiB part needs the tiled/K-reduction path long before this cap binds.
    vmem_limit_bytes = None
    if bytes_accessed * 4 > 16 * 1024 * 1024:
        vmem_limit_bytes = min(bytes_accessed * 4, 100 * 1024 * 1024)

    return pl.pallas_call(
        kernel,
        out_shape=jax.ShapeDtypeStruct((n, f_out), jnp.float32),
        grid=(1,),                                   # single step: no duplicated work,
        in_specs=in_specs,                           # no extra grid-step overhead
        out_specs=pl.BlockSpec((n, f_out), lambda i: (0, 0)),
        compiler_params=pltpu.CompilerParams(
            dimension_semantics=("arbitrary",),
            vmem_limit_bytes=vmem_limit_bytes,
        ),
        cost_estimate=pl.CostEstimate(
            flops=flops, transcendentals=0, bytes_accessed=bytes_accessed),
    )(x, adj, *weights)


# ----------------------------- references & driver -----------------------------

def gae_reference_f32(x, adj, weights):
    """Exact PyTorch-order f32 reference: act(adj @ (h @ w)) per layer."""
    h = x
    for li, w in enumerate(weights):
        h = adj @ (h @ w)
        if li < len(weights) - 1:
            h = jnp.maximum(h, 0.0)
    return h


def gae_reference_matched(x, adj, weights):
    """Pure-JAX reference mirroring the kernel's math exactly: bf16 MXU operands,
    f32 accumulation, f32 hidden activations, same per-layer contraction order."""
    cdt = jnp.bfloat16
    adj_c = adj.astype(cdt)
    h = x
    n_layers = len(weights)
    for li, w in enumerate(weights):
        f_in, f_out = w.shape
        if _use_hw_first(f_in, f_out):
            t = jnp.dot(h.astype(cdt), w.astype(cdt),
                        preferred_element_type=jnp.float32)
            h = jnp.dot(adj_c, t.astype(cdt), preferred_element_type=jnp.float32)
        else:
            t = jnp.dot(adj_c, h.astype(cdt), preferred_element_type=jnp.float32)
            h = jnp.dot(t.astype(cdt), w.astype(cdt),
                        preferred_element_type=jnp.float32)
        if li < n_layers - 1:
            h = jnp.maximum(h, 0.0)
    return h


def xavier_uniform(key, fan_in, fan_out):
    # torch.nn.init.xavier_uniform_: U(-a, a), a = sqrt(6 / (fan_in + fan_out))
    bound = (6.0 / (fan_in + fan_out)) ** 0.5
    return jax.random.uniform(
        key, (fan_in, fan_out), minval=-bound, maxval=bound, dtype=jnp.float32
    )


if __name__ == "__main__":
    # Small, deterministic synthetic problem.
    N = 128                       # number of graph nodes
    dimensions = [32, 64, 16]     # GAE dims: input -> hidden (ReLU) -> output (identity)
    # dropout = 0.0 (inference): F.dropout is a no-op, so it is omitted.

    key = jax.random.PRNGKey(0)
    k_x, k_adj, k_w0, k_w1 = jax.random.split(key, 4)

    # Node features.
    x = jax.random.normal(k_x, (N, dimensions[0]), dtype=jnp.float32)

    # Symmetric, row-normalized dense adjacency with self loops.
    a = (jax.random.uniform(k_adj, (N, N)) < 0.05).astype(jnp.float32)
    a = jnp.maximum(a, a.T) + jnp.eye(N, dtype=jnp.float32)
    deg = jnp.sum(a, axis=1, keepdims=True)
    adj = a / deg                 # dense stand-in for torch.spmm's sparse adj

    # Layer weights (xavier_uniform, matching GraphConvolution.reset_parameters).
    weights = [
        xavier_uniform(k_w0, dimensions[0], dimensions[1]),
        xavier_uniform(k_w1, dimensions[1], dimensions[2]),
    ]

    out = gae_forward(x, adj, weights)
    jax.block_until_ready(out)
    assert out.shape == (N, dimensions[-1])

    # Check 1: vs. a pure-JAX reference using the kernel's exact math
    # (bf16 MXU operands, f32 accumulation, same contraction order).
    ref_matched = gae_reference_matched(x, adj, weights)
    err_m = float(jnp.max(jnp.abs(out - ref_matched)))
    assert jnp.allclose(out, ref_matched, atol=1e-3, rtol=1e-3), err_m

    # Check 2: vs. the full-f32 PyTorch-order reference (bf16-operand tolerance).
    ref_f32 = gae_reference_f32(x, adj, weights)
    err_f = float(jnp.max(jnp.abs(out - ref_f32)))
    assert jnp.allclose(out, ref_f32, atol=2e-2, rtol=2e-2), err_f

    print("KERNEL_OK")
</pallas_src>

<mosaic_0001>
module attributes {stable_mosaic.version = 11 : i64} {
  func.func @_gae_fused_kernel(%arg0: i32, %arg1: memref<128x32xf32, #tpu.memory_space<vmem>>, %arg2: memref<128x128xf32, #tpu.memory_space<vmem>>, %arg3: memref<32x64xf32, #tpu.memory_space<vmem>>, %arg4: memref<64x16xf32, #tpu.memory_space<vmem>>, %arg5: memref<128x16xf32, #tpu.memory_space<vmem>>) attributes {dimension_semantics = [#tpu.dimension_semantics<arbitrary>], iteration_bounds = array<i64: 1>, scalar_prefetch = 0 : i64, scratch_operands = 0 : i64, tpu.core_type = #tpu.core_type<tc>, window_params = [{pipeline_mode = #tpu.pipeline_mode<synchronous>, transform_indices = @transform_0, window_bounds = array<i64: 128, 32>}, {pipeline_mode = #tpu.pipeline_mode<synchronous>, transform_indices = @transform_1, window_bounds = array<i64: 128, 128>}, {pipeline_mode = #tpu.pipeline_mode<synchronous>, transform_indices = @transform_2, window_bounds = array<i64: 32, 64>}, {pipeline_mode = #tpu.pipeline_mode<synchronous>, transform_indices = @transform_3, window_bounds = array<i64: 64, 16>}, {pipeline_mode = #tpu.pipeline_mode<synchronous>, transform_indices = @transform_4, window_bounds = array<i64: 128, 16>}]} {
    %c0 = arith.constant 0 : index
    %c0_0 = arith.constant 0 : index
    %0 = vector.load %arg2[%c0, %c0_0] : memref<128x128xf32, #tpu.memory_space<vmem>>, vector<128x128xf32>
    %1 = arith.truncf %0 : vector<128x128xf32> to vector<128x128xbf16>
    %c0_1 = arith.constant 0 : index
    %c0_2 = arith.constant 0 : index
    %2 = vector.load %arg1[%c0_1, %c0_2] : memref<128x32xf32, #tpu.memory_space<vmem>>, vector<128x32xf32>
    %c0_3 = arith.constant 0 : index
    %c0_4 = arith.constant 0 : index
    %3 = vector.load %arg3[%c0_3, %c0_4] : memref<32x64xf32, #tpu.memory_space<vmem>>, vector<32x64xf32>
    %4 = arith.truncf %2 : vector<128x32xf32> to vector<128x32xbf16>
    %5 = arith.truncf %3 : vector<32x64xf32> to vector<32x64xbf16>
    %cst = arith.constant dense<0.000000e+00> : vector<128x64xf32>
    %6 = tpu.matmul %4, %5, %cst {dimension_numbers = #tpu.dot_dimension_numbers<[1], [0], [0], [1], [0, 0, 1, 1], [], []>} : vector<128x32xbf16>, vector<32x64xbf16>, vector<128x64xf32> -> vector<128x64xf32>
    %7 = arith.truncf %6 : vector<128x64xf32> to vector<128x64xbf16>
    %cst_5 = arith.constant dense<0.000000e+00> : vector<128x64xf32>
    %8 = tpu.matmul %1, %7, %cst_5 {dimension_numbers = #tpu.dot_dimension_numbers<[1], [0], [0], [1], [0, 0, 1, 1], [], []>} : vector<128x128xbf16>, vector<128x64xbf16>, vector<128x64xf32> -> vector<128x64xf32>
    %cst_6 = arith.constant 0.000000e+00 : f32
    %9 = vector.broadcast %cst_6 : f32 to vector<128x64xf32>
    %10 = arith.maximumf %8, %9 : vector<128x64xf32>
    %c0_7 = arith.constant 0 : index
    %c0_8 = arith.constant 0 : index
    %11 = vector.load %arg4[%c0_7, %c0_8] : memref<64x16xf32, #tpu.memory_space<vmem>>, vector<64x16xf32>
    %12 = arith.truncf %10 : vector<128x64xf32> to vector<128x64xbf16>
    %cst_9 = arith.constant dense<0.000000e+00> : vector<128x64xf32>
    %13 = tpu.matmul %1, %12, %cst_9 {dimension_numbers = #tpu.dot_dimension_numbers<[1], [0], [0], [1], [0, 0, 1, 1], [], []>} : vector<128x128xbf16>, vector<128x64xbf16>, vector<128x64xf32> -> vector<128x64xf32>
    %14 = arith.truncf %13 : vector<128x64xf32> to vector<128x64xbf16>
    %15 = arith.truncf %11 : vector<64x16xf32> to vector<64x16xbf16>
    %cst_10 = arith.constant dense<0.000000e+00> : vector<128x16xf32>
    %16 = tpu.matmul %14, %15, %cst_10 {dimension_numbers = #tpu.dot_dimension_numbers<[1], [0], [0], [1], [0, 0, 1, 1], [], []>} : vector<128x64xbf16>, vector<64x16xbf16>, vector<128x16xf32> -> vector<128x16xf32>
    %c0_11 = arith.constant 0 : index
    %c0_12 = arith.constant 0 : index
    %17 = vector.load %arg5[%c0_11, %c0_12] : memref<128x16xf32, #tpu.memory_space<vmem>>, vector<128x16xf32>
    tpu.vector_store %arg5[%c0_11, %c0_12], %16 {strides = array<i32>} : memref<128x16xf32, #tpu.memory_space<vmem>>, vector<128x16xf32>,
    return
  }
  func.func @transform_0(%arg0: i32) -> (i32, i32) {
    %c0_i32 = arith.constant 0 : i32
    %c0_i32_0 = arith.constant 0 : i32
    %c0_i32_1 = arith.constant 0 : i32
    return %c0_i32, %c0_i32_0 : i32, i32
  }
  func.func @transform_1(%arg0: i32) -> (i32, i32) {
    %c0_i32 = arith.constant 0 : i32
    %c0_i32_0 = arith.constant 0 : i32
    %c0_i32_1 = arith.constant 0 : i32
    return %c0_i32, %c0_i32_0 : i32, i32
  }
  func.func @transform_2(%arg0: i32) -> (i32, i32) {
    %c0_i32 = arith.constant 0 : i32
    %c0_i32_0 = arith.constant 0 : i32
    %c0_i32_1 = arith.constant 0 : i32
    return %c0_i32, %c0_i32_0 : i32, i32
  }
  func.func @transform_3(%arg0: i32) -> (i32, i32) {
    %c0_i32 = arith.constant 0 : i32
    %c0_i32_0 = arith.constant 0 : i32
    %c0_i32_1 = arith.constant 0 : i32
    return %c0_i32, %c0_i32_0 : i32, i32
  }
  func.func @transform_4(%arg0: i32) -> (i32, i32) {
    %c0_i32 = arith.constant 0 : i32
    %c0_i32_0 = arith.constant 0 : i32
    %c0_i32_1 = arith.constant 0 : i32
    return %c0_i32, %c0_i32_0 : i32, i32
  }
}

</mosaic_0001>

<llo_original>
// kernel: tpu_custom_call.1
$region0: #{tpu_custom_call.1}
  #allocation0 [shape = 'u32[]', space=smem, size = 0x4, offset = 0x4, fixed_abs, tag = 'smem constant byte address 0x4 - core index']
  #allocation1 [shape = 'u32[72,128]{1,0:T(1,128)}', space=vmem, size = 0x9000, scoped, tag = 'internal scratch']
  %s0 = inlined_call_operand.vmem [shape: f32[128,32], index: 0, kind: input, shape index: {}]
  %s1 = inlined_call_operand.vmem [shape: f32[128,128], index: 1, kind: input, shape index: {}]
  %s2 = inlined_call_operand.vmem [shape: f32[32,64], index: 2, kind: input, shape index: {}]
  %s3 = inlined_call_operand.vmem [shape: f32[64,16], index: 3, kind: input, shape index: {}]
  %s4 = inlined_call_operand.vmem [shape: f32[128,16], index: 4, kind: output, shape index: {}]
  %s5 = sld [smem:[#allocation0]]
  $region26: #{tpu_custom_call.1} parent=0
    _
  %s7 = ssub.s32 1, %s5
  %s8 = scalar_select 0, %s7, %s5
  // Predicated region
  $region2: #{tpu_custom_call.1} parent=0 // pred_check
    _
  $region3: #{tpu_custom_call.1} parent=0 // pred_check_branch
    %10 = sbr.rel (0) target = $region5
  $region4: #{tpu_custom_call.1} parent=0 // pred_region
    _
  $region5: #{tpu_custom_call.1} parent=0 // pred_fallthru
    _
  // Predicated region
  $region6: #{tpu_custom_call.1} parent=0 // pred_check
    _
  $region7: #{tpu_custom_call.1} parent=0 // pred_check_branch
    %12 = sbr.rel (0) target = $region9
  $region8: #{tpu_custom_call.1} parent=0 // pred_region
    _
  $region9: #{tpu_custom_call.1} parent=0 // pred_fallthru
    _
  // Predicated region
  $region10: #{tpu_custom_call.1} parent=0 // pred_check
    _
  $region11: #{tpu_custom_call.1} parent=0 // pred_check_branch
    %14 = sbr.rel (0) target = $region13
  $region12: #{tpu_custom_call.1} parent=0 // pred_region
    _
  $region13: #{tpu_custom_call.1} parent=0 // pred_fallthru
    _
  // Predicated region
  $region14: #{tpu_custom_call.1} parent=0 // pred_check
    _
  $region15: #{tpu_custom_call.1} parent=0 // pred_check_branch
    %16 = sbr.rel (0) target = $region17
  $region16: #{tpu_custom_call.1} parent=0 // pred_region
    _
  $region17: #{tpu_custom_call.1} parent=0 // pred_fallthru
    _
  %v18 = vld [vmem:[%s1] sm:$0xff]
  %v19 = vld [vmem:[%s1 + $0x8] sm:$0xff]
  %v20 = vld [vmem:[%s1 + $0x10] sm:$0xff]
  %v21 = vld [vmem:[%s1 + $0x18] sm:$0xff]
  %v22 = vld [vmem:[%s1 + $0x20] sm:$0xff]
  %v23 = vld [vmem:[%s1 + $0x28] sm:$0xff]
  %v24 = vld [vmem:[%s1 + $0x30] sm:$0xff]
  %v25 = vld [vmem:[%s1 + $0x38] sm:$0xff]
  %v26 = vld [vmem:[%s1 + $0x40] sm:$0xff]
  %v27 = vld [vmem:[%s1 + $0x48] sm:$0xff]
  %v28 = vld [vmem:[%s1 + $0x50] sm:$0xff]
  %v29 = vld [vmem:[%s1 + $0x58] sm:$0xff]
  %v30 = vld [vmem:[%s1 + $0x60] sm:$0xff]
  %v31 = vld [vmem:[%s1 + $0x68] sm:$0xff]
  %v32 = vld [vmem:[%s1 + $0x70] sm:$0xff]
  %v33 = vld [vmem:[%s1 + $0x78] sm:$0xff]
  %v34 = vpack.c.bf16 %v19, %v18
  %v35 = vpack.c.bf16 %v21, %v20
  %v36 = vpack.c.bf16 %v23, %v22
  %v37 = vpack.c.bf16 %v25, %v24
  %v38 = vpack.c.bf16 %v27, %v26
  %v39 = vpack.c.bf16 %v29, %v28
  %v40 = vpack.c.bf16 %v31, %v30
  %v41 = vpack.c.bf16 %v33, %v32
  %v42 = vld [vmem:[%s0] sm:$0xff]
  %v43 = vld [vmem:[%s0 + $0x8] sm:$0xff]
  %v44 = vld [vmem:[%s0 + $0x10] sm:$0xff]
  %v45 = vld [vmem:[%s0 + $0x18] sm:$0xff]
  %v46 = vld [vmem:[%s0 + $0x20] sm:$0xff]
  %v47 = vld [vmem:[%s0 + $0x28] sm:$0xff]
  %v48 = vld [vmem:[%s0 + $0x30] sm:$0xff]
  %v49 = vld [vmem:[%s0 + $0x38] sm:$0xff]
  %v50 = vld [vmem:[%s0 + $0x40] sm:$0xff]
  %v51 = vld [vmem:[%s0 + $0x48] sm:$0xff]
  %v52 = vld [vmem:[%s0 + $0x50] sm:$0xff]
  %v53 = vld [vmem:[%s0 + $0x58] sm:$0xff]
  %v54 = vld [vmem:[%s0 + $0x60] sm:$0xff]
  %v55 = vld [vmem:[%s0 + $0x68] sm:$0xff]
  %v56 = vld [vmem:[%s0 + $0x70] sm:$0xff]
  %v57 = vld [vmem:[%s0 + $0x78] sm:$0xff]
  %v58 = vld [vmem:[%s2] sm:$0xff]
  %v59 = vld [vmem:[%s2 + $0x8] sm:$0xff]
  %v60 = vld [vmem:[%s2 + $0x10] sm:$0xff]
  %v61 = vld [vmem:[%s2 + $0x18] sm:$0xff]
  %v62 = vpack.c.bf16 %v43, %v42
  %v63 = vpack.c.bf16 %v45, %v44
  %v64 = vpack.c.bf16 %v47, %v46
  %v65 = vpack.c.bf16 %v49, %v48
  %v66 = vpack.c.bf16 %v51, %v50
  %v67 = vpack.c.bf16 %v53, %v52
  %v68 = vpack.c.bf16 %v55, %v54
  %v69 = vpack.c.bf16 %v57, %v56
  %v70 = vpack.c.bf16 %v59, %v58
  %v71 = vpack.c.bf16 %v61, %v60
  %vm72 = vcmask 261120
  %v74 = vsel %vm72, %v62, 0
  %v77 = vsel %vm72, %v63, 0
  %v80 = vsel %vm72, %v64, 0
  %v83 = vsel %vm72, %v65, 0
  %v86 = vsel %vm72, %v66, 0
  %v89 = vsel %vm72, %v67, 0
  %v92 = vsel %vm72, %v68, 0
  %v95 = vsel %vm72, %v69, 0
  %97 = vmatpush.bf16.msra.mxu0 0
  %98 = vmatpush.bf16.msra.mxu0 0
  %99 = vmatpush.bf16.msra.mxu0 0
  %100 = vmatpush.bf16.msra.mxu0 0
  %101 = vmatpush.bf16.msra.mxu0 0
  %102 = vmatpush.bf16.msra.mxu0 0
  %103 = vmatpush.bf16.msra.mxu0 %v71
  %104 = vmatpush.bf16.msra.mxu0 %v70
  %105 = vmatmul.bf16.gmra.mxu0 %v74
  %v106 = vpop.f32.mrf.mxu0
  %v107 = vadd.f32 0.0, %v106
  %v108 = vpop.f32.mrf.mxu0
  %v109 = vadd.f32 0.0, %v108
  %110 = vmatmul.bf16.gmra.mxu0 %v77
  %v111 = vpop.f32.mrf.mxu0
  %v112 = vadd.f32 0.0, %v111
  %v113 = vpop.f32.mrf.mxu0
  %v114 = vadd.f32 0.0, %v113
  %115 = vmatmul.bf16.gmra.mxu0 %v80
  %v116 = vpop.f32.mrf.mxu0
  %v117 = vadd.f32 0.0, %v116
  %v118 = vpop.f32.mrf.mxu0
  %v119 = vadd.f32 0.0, %v118
  %120 = vmatmul.bf16.gmra.mxu0 %v83
  %v121 = vpop.f32.mrf.mxu0
  %v122 = vadd.f32 0.0, %v121
  %v123 = vpop.f32.mrf.mxu0
  %v124 = vadd.f32 0.0, %v123
  %125 = vmatmul.bf16.gmra.mxu0 %v86
  %v126 = vpop.f32.mrf.mxu0
  %v127 = vadd.f32 0.0, %v126
  %v128 = vpop.f32.mrf.mxu0
  %v129 = vadd.f32 0.0, %v128
  %130 = vmatmul.bf16.gmra.mxu0 %v89
  %v131 = vpop.f32.mrf.mxu0
  %v132 = vadd.f32 0.0, %v131
  %v133 = vpop.f32.mrf.mxu0
  %v134 = vadd.f32 0.0, %v133
  %135 = vmatmul.bf16.gmra.mxu0 %v92
  %v136 = vpop.f32.mrf.mxu0
  %v137 = vadd.f32 0.0, %v136
  %v138 = vpop.f32.mrf.mxu0
  %v139 = vadd.f32 0.0, %v138
  %140 = vmatmul.bf16.gmra.mxu0 %v95
  %v141 = vpop.f32.mrf.mxu0
  %v142 = vadd.f32 0.0, %v141
  %v143 = vpop.f32.mrf.mxu0
  %v144 = vadd.f32 0.0, %v143
  %145 = vdwg.mxu0
  %v146 = vpack.c.bf16 %v109, %v107
  %v147 = vpack.c.bf16 %v114, %v112
  %v148 = vpack.c.bf16 %v119, %v117
  %v149 = vpack.c.bf16 %v124, %v122
  %v150 = vpack.c.bf16 %v129, %v127
  %v151 = vpack.c.bf16 %v134, %v132
  %v152 = vpack.c.bf16 %v139, %v137
  %v153 = vpack.c.bf16 %v144, %v142
  %154 = vmatpush.bf16.msra.mxu0 %v153
  %155 = vmatpush.bf16.msra.mxu0 %v152
  %156 = vmatpush.bf16.msra.mxu0 %v151
  %157 = vmatpush.bf16.msra.mxu0 %v150
  %158 = vmatpush.bf16.msra.mxu0 %v149
  %159 = vmatpush.bf16.msra.mxu0 %v148
  %160 = vmatpush.bf16.msra.mxu0 %v147
  %161 = vmatpush.bf16.msra.mxu0 %v146
  %162 = vmatmul.bf16.gmra.mxu0 %v34
  %v163 = vpop.f32.mrf.mxu0
  %v164 = vadd.f32 0.0, %v163
  %v165 = vpop.f32.mrf.mxu0
  %v166 = vadd.f32 0.0, %v165
  %167 = vmatmul.bf16.gmra.mxu0 %v35
  %v168 = vpop.f32.mrf.mxu0
  %v169 = vadd.f32 0.0, %v168
  %v170 = vpop.f32.mrf.mxu0
  %v171 = vadd.f32 0.0, %v170
  %172 = vmatmul.bf16.gmra.mxu0 %v36
  %v173 = vpop.f32.mrf.mxu0
  %v174 = vadd.f32 0.0, %v173
  %v175 = vpop.f32.mrf.mxu0
  %v176 = vadd.f32 0.0, %v175
  %177 = vmatmul.bf16.gmra.mxu0 %v37
  %v178 = vpop.f32.mrf.mxu0
  %v179 = vadd.f32 0.0, %v178
  %v180 = vpop.f32.mrf.mxu0
  %v181 = vadd.f32 0.0, %v180
  %182 = vmatmul.bf16.gmra.mxu0 %v38
  %v183 = vpop.f32.mrf.mxu0
  %v184 = vadd.f32 0.0, %v183
  %v185 = vpop.f32.mrf.mxu0
  %v186 = vadd.f32 0.0, %v185
  %187 = vmatmul.bf16.gmra.mxu0 %v39
  %v188 = vpop.f32.mrf.mxu0
  %v189 = vadd.f32 0.0, %v188
  %v190 = vpop.f32.mrf.mxu0
  %v191 = vadd.f32 0.0, %v190
  %192 = vmatmul.bf16.gmra.mxu0 %v40
  %v193 = vpop.f32.mrf.mxu0
  %v194 = vadd.f32 0.0, %v193
  %v195 = vpop.f32.mrf.mxu0
  %v196 = vadd.f32 0.0, %v195
  %197 = vmatmul.bf16.gmra.mxu0 %v41
  %v198 = vpop.f32.mrf.mxu0
  %v199 = vadd.f32 0.0, %v198
  %v200 = vpop.f32.mrf.mxu0
  %v201 = vadd.f32 0.0, %v200
  %202 = vdwg.mxu0
  %v203 = vmax.f32 %v164, 0.0
  %v204 = vmax.f32 %v166, 0.0
  %v205 = vmax.f32 %v169, 0.0
  %v206 = vmax.f32 %v171, 0.0
  %v207 = vmax.f32 %v174, 0.0
  %v208 = vmax.f32 %v176, 0.0
  %v209 = vmax.f32 %v179, 0.0
  %v210 = vmax.f32 %v181, 0.0
  %v211 = vmax.f32 %v184, 0.0
  %v212 = vmax.f32 %v186, 0.0
  %v213 = vmax.f32 %v189, 0.0
  %v214 = vmax.f32 %v191, 0.0
  %v215 = vmax.f32 %v194, 0.0
  %v216 = vmax.f32 %v196, 0.0
  %v217 = vmax.f32 %v199, 0.0
  %v218 = vmax.f32 %v201, 0.0
  %v219 = vld [vmem:[%s3] sm:$0xff]
  %v220 = vld [vmem:[%s3 + $0x8] sm:$0xff]
  %v221 = vld [vmem:[%s3 + $0x10] sm:$0xff]
  %v222 = vld [vmem:[%s3 + $0x18] sm:$0xff]
  %v223 = vld [vmem:[%s3 + $0x20] sm:$0xff]
  %v224 = vld [vmem:[%s3 + $0x28] sm:$0xff]
  %v225 = vld [vmem:[%s3 + $0x30] sm:$0xff]
  %v226 = vld [vmem:[%s3 + $0x38] sm:$0xff]
  %v227 = vpack.c.bf16 %v204, %v203
  %v228 = vpack.c.bf16 %v206, %v205
  %v229 = vpack.c.bf16 %v208, %v207
  %v230 = vpack.c.bf16 %v210, %v209
  %v231 = vpack.c.bf16 %v212, %v211
  %v232 = vpack.c.bf16 %v214, %v213
  %v233 = vpack.c.bf16 %v216, %v215
  %v234 = vpack.c.bf16 %v218, %v217
  %235 = vmatpush.bf16.msra.mxu0 %v234
  %236 = vmatpush.bf16.msra.mxu0 %v233
  %237 = vmatpush.bf16.msra.mxu0 %v232
  %238 = vmatpush.bf16.msra.mxu0 %v231
  %239 = vmatpush.bf16.msra.mxu0 %v230
  %240 = vmatpush.bf16.msra.mxu0 %v229
  %241 = vmatpush.bf16.msra.mxu0 %v228
  %242 = vmatpush.bf16.msra.mxu0 %v227
  %243 = vmatmul.bf16.gmra.mxu0 %v34
  %v244 = vpop.f32.mrf.mxu0
  %v245 = vadd.f32 0.0, %v244
  %v246 = vpop.f32.mrf.mxu0
  %v247 = vadd.f32 0.0, %v246
  %248 = vmatmul.bf16.gmra.mxu0 %v35
  %v249 = vpop.f32.mrf.mxu0
  %v250 = vadd.f32 0.0, %v249
  %v251 = vpop.f32.mrf.mxu0
  %v252 = vadd.f32 0.0, %v251
  %253 = vmatmul.bf16.gmra.mxu0 %v36
  %v254 = vpop.f32.mrf.mxu0
  %v255 = vadd.f32 0.0, %v254
  %v256 = vpop.f32.mrf.mxu0
  %v257 = vadd.f32 0.0, %v256
  %258 = vmatmul.bf16.gmra.mxu0 %v37
  %v259 = vpop.f32.mrf.mxu0
  %v260 = vadd.f32 0.0, %v259
  %v261 = vpop.f32.mrf.mxu0
  %v262 = vadd.f32 0.0, %v261
  %263 = vmatmul.bf16.gmra.mxu0 %v38
  %v264 = vpop.f32.mrf.mxu0
  %v265 = vadd.f32 0.0, %v264
  %v266 = vpop.f32.mrf.mxu0
  %v267 = vadd.f32 0.0, %v266
  %268 = vmatmul.bf16.gmra.mxu0 %v39
  %v269 = vpop.f32.mrf.mxu0
  %v270 = vadd.f32 0.0, %v269
  %v271 = vpop.f32.mrf.mxu0
  %v272 = vadd.f32 0.0, %v271
  %273 = vmatmul.bf16.gmra.mxu0 %v40
  %v274 = vpop.f32.mrf.mxu0
  %v275 = vadd.f32 0.0, %v274
  %v276 = vpop.f32.mrf.mxu0
  %v277 = vadd.f32 0.0, %v276
  %278 = vmatmul.bf16.gmra.mxu0 %v41
  %v279 = vpop.f32.mrf.mxu0
  %v280 = vadd.f32 0.0, %v279
  %v281 = vpop.f32.mrf.mxu0
  %v282 = vadd.f32 0.0, %v281
  %283 = vdwg.mxu0
  %v284 = vpack.c.bf16 %v247, %v245
  %v285 = vpack.c.bf16 %v252, %v250
  %v286 = vpack.c.bf16 %v257, %v255
  %v287 = vpack.c.bf16 %v262, %v260
  %v288 = vpack.c.bf16 %v267, %v265
  %v289 = vpack.c.bf16 %v272, %v270
  %v290 = vpack.c.bf16 %v277, %v275
  %v291 = vpack.c.bf16 %v282, %v280
  %v292 = vpack.c.bf16 %v220, %v219
  %v293 = vpack.c.bf16 %v222, %v221
  %v294 = vpack.c.bf16 %v224, %v223
  %v295 = vpack.c.bf16 %v226, %v225
  %vm296 = vcmask 523264
  %v298 = vsel %vm296, %v284, 0
  %v301 = vsel %vm296, %v285, 0
  %v304 = vsel %vm296, %v286, 0
  %v307 = vsel %vm296, %v287, 0
  %v310 = vsel %vm296, %v288, 0
  %v313 = vsel %vm296, %v289, 0
  %v316 = vsel %vm296, %v290, 0
  %v319 = vsel %vm296, %v291, 0
  %321 = vmatpush.bf16.msra.mxu0 0
  %322 = vmatpush.bf16.msra.mxu0 0
  %323 = vmatpush.bf16.msra.mxu0 0
  %324 = vmatpush.bf16.msra.mxu0 0
  %325 = vmatpush.bf16.msra.mxu0 %v295
  %326 = vmatpush.bf16.msra.mxu0 %v294
  %327 = vmatpush.bf16.msra.mxu0 %v293
  %328 = vmatpush.bf16.msra.mxu0 %v292
  %329 = vmatmul.bf16.gmra.mxu0 %v298
  %v330 = vpop.f32.mrf.mxu0
  %v331 = vadd.f32 0.0, %v330
  %v332 = vpop.f32.mrf.mxu0
  %v333 = vadd.f32 0.0, %v332
  %334 = vmatmul.bf16.gmra.mxu0 %v301
  %v335 = vpop.f32.mrf.mxu0
  %v336 = vadd.f32 0.0, %v335
  %v337 = vpop.f32.mrf.mxu0
  %v338 = vadd.f32 0.0, %v337
  %339 = vmatmul.bf16.gmra.mxu0 %v304
  %v340 = vpop.f32.mrf.mxu0
  %v341 = vadd.f32 0.0, %v340
  %v342 = vpop.f32.mrf.mxu0
  %v343 = vadd.f32 0.0, %v342
  %344 = vmatmul.bf16.gmra.mxu0 %v307
  %v345 = vpop.f32.mrf.mxu0
  %v346 = vadd.f32 0.0, %v345
  %v347 = vpop.f32.mrf.mxu0
  %v348 = vadd.f32 0.0, %v347
  %349 = vmatmul.bf16.gmra.mxu0 %v310
  %v350 = vpop.f32.mrf.mxu0
  %v351 = vadd.f32 0.0, %v350
  %v352 = vpop.f32.mrf.mxu0
  %v353 = vadd.f32 0.0, %v352
  %354 = vmatmul.bf16.gmra.mxu0 %v313
  %v355 = vpop.f32.mrf.mxu0
  %v356 = vadd.f32 0.0, %v355
  %v357 = vpop.f32.mrf.mxu0
  %v358 = vadd.f32 0.0, %v357
  %359 = vmatmul.bf16.gmra.mxu0 %v316
  %v360 = vpop.f32.mrf.mxu0
  %v361 = vadd.f32 0.0, %v360
  %v362 = vpop.f32.mrf.mxu0
  %v363 = vadd.f32 0.0, %v362
  %364 = vmatmul.bf16.gmra.mxu0 %v319
  %v365 = vpop.f32.mrf.mxu0
  %v366 = vadd.f32 0.0, %v365
  %v367 = vpop.f32.mrf.mxu0
  %v368 = vadd.f32 0.0, %v367
  %369 = vdwg.mxu0
  %vm370 = vcmask 130048
  %371 = vst.msk [vmem:[%s4] sm:$0xff] %vm370, %v331
  %372 = vst.msk [vmem:[%s4 + $0x8] sm:$0xff] %vm370, %v333
  %373 = vst.msk [vmem:[%s4 + $0x10] sm:$0xff] %vm370, %v336
  %374 = vst.msk [vmem:[%s4 + $0x18] sm:$0xff] %vm370, %v338
  %375 = vst.msk [vmem:[%s4 + $0x20] sm:$0xff] %vm370, %v341
  %376 = vst.msk [vmem:[%s4 + $0x28] sm:$0xff] %vm370, %v343
  %377 = vst.msk [vmem:[%s4 + $0x30] sm:$0xff] %vm370, %v346
  %378 = vst.msk [vmem:[%s4 + $0x38] sm:$0xff] %vm370, %v348
  %379 = vst.msk [vmem:[%s4 + $0x40] sm:$0xff] %vm370, %v351
  %380 = vst.msk [vmem:[%s4 + $0x48] sm:$0xff] %vm370, %v353
  %381 = vst.msk [vmem:[%s4 + $0x50] sm:$0xff] %vm370, %v356
  %382 = vst.msk [vmem:[%s4 + $0x58] sm:$0xff] %vm370, %v358
  %383 = vst.msk [vmem:[%s4 + $0x60] sm:$0xff] %vm370, %v361
  %384 = vst.msk [vmem:[%s4 + $0x68] sm:$0xff] %vm370, %v363
  %385 = vst.msk [vmem:[%s4 + $0x70] sm:$0xff] %vm370, %v366
  %386 = vst.msk [vmem:[%s4 + $0x78] sm:$0xff] %vm370, %v368
  // Predicated region
  $region18: #{tpu_custom_call.1} parent=0 // pred_check
    _
  $region19: #{tpu_custom_call.1} parent=0 // pred_check_branch
    %388 = sbr.rel (0) target = $region21
  $region20: #{tpu_custom_call.1} parent=0 // pred_region
    _
  $region21: #{tpu_custom_call.1} parent=0 // pred_fallthru
    _
  // Predicated region
  $region22: #{tpu_custom_call.1} parent=0 // pred_check
    _
  $region23: #{tpu_custom_call.1} parent=0 // pred_check_branch
    %390 = sbr.rel (0) target = $region25
  $region24: #{tpu_custom_call.1} parent=0 // pred_region
    _
  $region25: #{tpu_custom_call.1} parent=0 // pred_fallthru
    _

</llo_original>
